<compile_context>
chip_gen: v7x
topology: tpu7x:2x2x1
jax: 0.10.0
libtpu: 0.0.40
codegen_flags: <defaults>
</compile_context>

<pallas_src>
import functools
import math

import jax
import jax.numpy as jnp
from jax.experimental import pallas as pl
from jax.experimental.pallas import tpu as pltpu


def _round_up(a: int, b: int) -> int:
    return ((a + b - 1) // b) * b


def _linear_kernel_f32(x_ref, w_ref, b_ref, o_ref, *, cast_bf16):
    # x_ref: (tm, tk), w_ref: (tk, tn), b_ref: (1, tn), o_ref: (tm, tn) f32.
    # Output block is resident across the K grid axis => accumulate in place.
    k = pl.program_id(2)

    @pl.when(k == 0)
    def _():
        o_ref[...] = jnp.broadcast_to(b_ref[...].astype(jnp.float32), o_ref.shape)

    a = x_ref[...]
    b = w_ref[...]
    if cast_bf16:
        # Optional: ~3-4x MXU throughput on v5e/v6e/v7x, f32 accumulation kept.
        a = a.astype(jnp.bfloat16)
        b = b.astype(jnp.bfloat16)
    o_ref[...] += jnp.dot(a, b, preferred_element_type=jnp.float32)


def _linear_kernel_acc(x_ref, w_ref, b_ref, o_ref, acc_ref, *, cast_bf16):
    # Same as above but with an f32 scratch accumulator for non-f32 outputs.
    k = pl.program_id(2)

    @pl.when(k == 0)
    def _():
        acc_ref[...] = jnp.broadcast_to(
            b_ref[...].astype(jnp.float32), acc_ref.shape
        )

    a = x_ref[...]
    b = w_ref[...]
    if cast_bf16:
        a = a.astype(jnp.bfloat16)
        b = b.astype(jnp.bfloat16)
    acc_ref[...] += jnp.dot(a, b, preferred_element_type=jnp.float32)

    @pl.when(k == pl.num_programs(2) - 1)
    def _():
        o_ref[...] = acc_ref[...].astype(o_ref.dtype)


def pallas_linear(x, weight_t, bias, *, tm=512, tn=1024, tk=512, cast_to_bf16=False):
    """y = x @ weight_t + bias, equivalent to torch.nn.Linear forward.

    x:        (M, K)
    weight_t: (K, N)   (torch weight of shape (N, K), pre-transposed / cached)
    bias:     (N,)
    """
    M, K = x.shape
    K2, N = weight_t.shape
    assert K == K2, (K, K2)
    assert bias.shape == (N,), bias.shape
    out_dtype = x.dtype

    # --- Tile selection ------------------------------------------------------
    # Skinny-M (GEMV-like) is pure weight streaming: bigger K tile, moderate N
    # tile (>=2 N blocks when N allows so both v7x TCs get work), and deeper
    # weight buffering below to hide DMA latency on v5e/v6e.
    skinny = M <= 64
    if skinny:
        tk = max(tk, 1024)
        tn = min(tn, 512)
    tm = min(tm, _round_up(M, 8))        # sublane-aligned block
    tn = min(tn, _round_up(N, 128))      # lane-aligned block
    tk = min(tk, _round_up(K, 128))

    # If both parallel grid axes collapse to a single block, split M so v7x's
    # second TensorCore is not idle (harmless on single-TC chips).
    if not skinny and pl.cdiv(M, tm) == 1 and pl.cdiv(N, tn) == 1 and M >= 16:
        tm = _round_up(pl.cdiv(M, 2), 8)

    # --- Padding: only the reduction axis needs zeros. Garbage in partial M/N
    # edge blocks only reaches output positions that are never written back.
    Kp = _round_up(K, tk)
    if Kp != K:
        x = jnp.pad(x, ((0, 0), (0, Kp - K)))
        weight_t = jnp.pad(weight_t, ((0, Kp - K), (0, 0)))
    bias2d = bias.reshape(1, N)

    grid = (pl.cdiv(M, tm), pl.cdiv(N, tn), Kp // tk)
    grid_m, grid_n, _ = grid

    # --- Cost estimate: account for x / W re-streaming across N / M blocks.
    cost = pl.CostEstimate(
        flops=2 * M * N * Kp,
        transcendentals=0,
        bytes_accessed=(
            M * Kp * x.dtype.itemsize * grid_n
            + Kp * N * weight_t.dtype.itemsize * grid_m
            + N * bias.dtype.itemsize * grid_m
            + M * N * jnp.dtype(out_dtype).itemsize
        ),
    )

    use_acc_scratch = out_dtype != jnp.float32
    n_wbuf_req = 3 if skinny else 2

    # --- VMEM budget: real footprint + headroom, capped at 48 MiB (v7x-safe).
    est_vmem = 4 * (
        2 * tm * tk                       # x tiles (double buffered)
        + n_wbuf_req * tk * tn            # weight tiles
        + 2 * tn                          # bias tiles
        + 2 * tm * tn                     # output tiles
        + (tm * tn if use_acc_scratch else 0)
    )
    vmem_limit = min(max(est_vmem + (8 << 20), 32 << 20), 48 << 20)

    def build(weight_buffers):
        w_kwargs = {}
        if weight_buffers != 2 and hasattr(pl, "Buffered"):
            w_kwargs = dict(pipeline_mode=pl.Buffered(weight_buffers))
        try:
            w_spec = pl.BlockSpec((tk, tn), lambda i, j, k: (k, j), **w_kwargs)
        except TypeError:
            w_spec = pl.BlockSpec((tk, tn), lambda i, j, k: (k, j))

        if use_acc_scratch:
            kernel = functools.partial(_linear_kernel_acc, cast_bf16=cast_to_bf16)
            scratch = [pltpu.VMEM((tm, tn), jnp.float32)]
        else:
            kernel = functools.partial(_linear_kernel_f32, cast_bf16=cast_to_bf16)
            scratch = []

        return pl.pallas_call(
            kernel,
            out_shape=jax.ShapeDtypeStruct((M, N), out_dtype),
            grid_spec=pltpu.PrefetchScalarGridSpec(
                num_scalar_prefetch=0,
                grid=grid,
                in_specs=[
                    pl.BlockSpec((tm, tk), lambda i, j, k: (i, k)),
                    w_spec,
                    pl.BlockSpec((1, tn), lambda i, j, k: (0, j)),
                ],
                out_specs=pl.BlockSpec((tm, tn), lambda i, j, k: (i, j)),
                scratch_shapes=scratch,
            ),
            compiler_params=pltpu.CompilerParams(
                dimension_semantics=("parallel", "parallel", "arbitrary"),
                vmem_limit_bytes=vmem_limit,
            ),
            cost_estimate=cost,
        )

    if n_wbuf_req != 2:
        try:
            return build(n_wbuf_req)(x, weight_t, bias2d)
        except Exception:
            # Deeper weight buffering unsupported on this jax/libtpu combo:
            # fall back to the default double-buffered pipeline.
            pass
    return build(2)(x, weight_t, bias2d)


if __name__ == "__main__":
    key = jax.random.PRNGKey(0)
    k1, k2, k3, k4, k5, k6 = jax.random.split(key, 6)

    # --- Case 1: TorchLinearModule(in_size=32, out_size=64) on a batch of 8 ---
    batch, in_size, out_size = 8, 32, 64
    bound = 1.0 / math.sqrt(in_size)
    # torch stores weight as (out, in); cache the transposed copy once so the
    # per-call hot path never re-transposes (hoisted per perf review).
    weight = jax.random.uniform(k1, (out_size, in_size), jnp.float32, -bound, bound)
    weight_t = jnp.asarray(weight.T)
    bias = jax.random.uniform(k2, (out_size,), jnp.float32, -bound, bound)
    x = jax.random.normal(k3, (batch, in_size), jnp.float32)

    y = pallas_linear(x, weight_t, bias)
    jax.block_until_ready(y)
    y_ref = x @ weight_t + bias
    assert y.shape == (batch, out_size)
    assert jnp.allclose(y, y_ref, atol=1e-5, rtol=1e-5)

    # --- Case 2: exercises the tiled grid, K accumulation, and exact-N tiles ---
    M2, K2, N2 = 256, 1024, 640
    bound2 = 1.0 / math.sqrt(K2)
    weight2_t = jnp.asarray(
        jax.random.uniform(k4, (N2, K2), jnp.float32, -bound2, bound2).T
    )
    bias2 = jax.random.uniform(k5, (N2,), jnp.float32, -bound2, bound2)
    x2 = jax.random.normal(k6, (M2, K2), jnp.float32)

    y2 = pallas_linear(x2, weight2_t, bias2)
    jax.block_until_ready(y2)
    y2_ref = x2 @ weight2_t + bias2
    assert y2.shape == (M2, N2)
    assert jnp.allclose(y2, y2_ref, atol=1e-4, rtol=1e-4)

    print("KERNEL_OK")
</pallas_src>

<mosaic_0001>
module attributes {stable_mosaic.version = 11 : i64} {
  func.func @_linear_kernel_f32(%arg0: i32, %arg1: i32, %arg2: i32, %arg3: memref<8x128xf32, #tpu.memory_space<vmem>>, %arg4: memref<128x128xf32, #tpu.memory_space<vmem>>, %arg5: memref<1x128xf32, #tpu.memory_space<vmem>>, %arg6: memref<8x128xf32, #tpu.memory_space<vmem>>) attributes {dimension_semantics = [#tpu.dimension_semantics<parallel>, #tpu.dimension_semantics<parallel>, #tpu.dimension_semantics<arbitrary>], iteration_bounds = array<i64: 1, 1, 1>, scalar_prefetch = 0 : i64, scratch_operands = 0 : i64, tpu.core_type = #tpu.core_type<tc>, window_params = [{transform_indices = @transform_0, window_bounds = array<i64: 8, 128>}, {transform_indices = @transform_1, window_bounds = array<i64: 128, 128>}, {transform_indices = @transform_2, window_bounds = array<i64: 1, 128>}, {transform_indices = @transform_3, window_bounds = array<i64: 8, 128>}]} {
    %c0_i32 = arith.constant 0 : i32
    %0 = arith.cmpi eq, %arg2, %c0_i32 : i32
    %1 = arith.extui %0 : i1 to i32
    %c0_i32_0 = arith.constant 0 : i32
    %2 = arith.cmpi ne, %1, %c0_i32_0 : i32
    scf.if %2 {
      %c0_8 = arith.constant 0 : index
      %c0_9 = arith.constant 0 : index
      %9 = vector.load %arg5[%c0_8, %c0_9] : memref<1x128xf32, #tpu.memory_space<vmem>>, vector<1x128xf32>
      %10 = vector.shape_cast %9 : vector<1x128xf32> to vector<1x128xf32>
      %11 = vector.broadcast %10 : vector<1x128xf32> to vector<8x128xf32>
      %c0_10 = arith.constant 0 : index
      %c0_11 = arith.constant 0 : index
      %12 = vector.load %arg6[%c0_10, %c0_11] : memref<8x128xf32, #tpu.memory_space<vmem>>, vector<8x128xf32>
      tpu.vector_store %arg6[%c0_10, %c0_11], %11 {strides = array<i32>} : memref<8x128xf32, #tpu.memory_space<vmem>>, vector<8x128xf32>,
    } else {
    }
    %c0 = arith.constant 0 : index
    %c0_1 = arith.constant 0 : index
    %3 = vector.load %arg3[%c0, %c0_1] : memref<8x128xf32, #tpu.memory_space<vmem>>, vector<8x128xf32>
    %c0_2 = arith.constant 0 : index
    %c0_3 = arith.constant 0 : index
    %4 = vector.load %arg4[%c0_2, %c0_3] : memref<128x128xf32, #tpu.memory_space<vmem>>, vector<128x128xf32>
    %c0_4 = arith.constant 0 : index
    %c0_5 = arith.constant 0 : index
    %5 = vector.load %arg6[%c0_4, %c0_5] : memref<8x128xf32, #tpu.memory_space<vmem>>, vector<8x128xf32>
    %cst = arith.constant dense<0.000000e+00> : vector<8x128xf32>
    %6 = tpu.matmul %3, %4, %cst {dimension_numbers = #tpu.dot_dimension_numbers<[1], [0], [0], [1], [0, 0, 1, 1], [], []>} : vector<8x128xf32>, vector<128x128xf32>, vector<8x128xf32> -> vector<8x128xf32>
    %7 = arith.addf %5, %6 : vector<8x128xf32>
    %c0_6 = arith.constant 0 : index
    %c0_7 = arith.constant 0 : index
    %8 = vector.load %arg6[%c0_6, %c0_7] : memref<8x128xf32, #tpu.memory_space<vmem>>, vector<8x128xf32>
    tpu.vector_store %arg6[%c0_6, %c0_7], %7 {strides = array<i32>} : memref<8x128xf32, #tpu.memory_space<vmem>>, vector<8x128xf32>,
    return
  }
  func.func @transform_0(%arg0: i32, %arg1: i32, %arg2: i32) -> (i32, i32) {
    %c0_i32 = arith.constant 0 : i32
    return %arg0, %arg2 : i32, i32
  }
  func.func @transform_1(%arg0: i32, %arg1: i32, %arg2: i32) -> (i32, i32) {
    %c0_i32 = arith.constant 0 : i32
    return %arg2, %arg1 : i32, i32
  }
  func.func @transform_2(%arg0: i32, %arg1: i32, %arg2: i32) -> (i32, i32) {
    %c0_i32 = arith.constant 0 : i32
    %c0_i32_0 = arith.constant 0 : i32
    return %c0_i32, %arg1 : i32, i32
  }
  func.func @transform_3(%arg0: i32, %arg1: i32, %arg2: i32) -> (i32, i32) {
    %c0_i32 = arith.constant 0 : i32
    return %arg0, %arg1 : i32, i32
  }
}

</mosaic_0001>

<llo_original>
// kernel: tpu_custom_call.1
$region0: #{tpu_custom_call.1}
  #allocation0 [shape = 'u32[]', space=smem, size = 0x4, offset = 0x4, fixed_abs, tag = 'smem constant byte address 0x4 - core index']
  #allocation1 [shape = 'u32[144,128]{1,0:T(1,128)}', space=vmem, size = 0x12000, scoped, tag = 'internal scratch']
  %s0 = inlined_call_operand.vmem [shape: f32[8,128], index: 0, kind: input, shape index: {}]
  %s1 = inlined_call_operand.vmem [shape: f32[128,64], index: 1, kind: input, shape index: {}]
  %s2 = inlined_call_operand.vmem [shape: f32[1,64], index: 2, kind: input, shape index: {}]
  %s3 = inlined_call_operand.hbm [shape: f32[8,64], index: 3, kind: output, shape index: {}]
  %s4 = sld [smem:[#allocation0]]
  $region26: #{tpu_custom_call.1} parent=0
    _
  %s6 = ssub.s32 1, %s4
  %s7 = scalar_select 0, %s6, %s4
  $region1: #{tpu_custom_call.1} parent=0
    #allocation2 [shape = 'u8[4096]{0}', space=vmem, size = 0x1000, scoped, tag = 'output window, operand 0, single buffered']
    #allocation3 [shape = 's32[1]{0}', space=sflag, size = 0x4, scoped, tag = 'scoped memory for tpu_custom_call.1']
    %8 = vsyncpa [#allocation3], 0
    // Predicated region
    $region2: #{tpu_custom_call.1} parent=1 // pred_check
      _
    $region3: #{tpu_custom_call.1} parent=1 // pred_check_branch
      %10 = sbr.rel (0) target = $region5
    $region4: #{tpu_custom_call.1} parent=1 // pred_region
      _
    $region5: #{tpu_custom_call.1} parent=1 // pred_fallthru
      _
    // Predicated region
    $region6: #{tpu_custom_call.1} parent=1 // pred_check
      _
    $region7: #{tpu_custom_call.1} parent=1 // pred_check_branch
      %12 = sbr.rel (0) target = $region9
    $region8: #{tpu_custom_call.1} parent=1 // pred_region
      _
    $region9: #{tpu_custom_call.1} parent=1 // pred_fallthru
      _
    // Predicated region
    $region10: #{tpu_custom_call.1} parent=1 // pred_check
      _
    $region11: #{tpu_custom_call.1} parent=1 // pred_check_branch
      %14 = sbr.rel (0) target = $region13
    $region12: #{tpu_custom_call.1} parent=1 // pred_region
      _
    $region13: #{tpu_custom_call.1} parent=1 // pred_fallthru
      _
    %p15 = scmp.eq.s32.totalorder 0, 0
    // Predicated region
    $region14: #{tpu_custom_call.1} parent=1 // pred_check
      %p16 = pneg %p15
    $region15: #{tpu_custom_call.1} parent=1 // pred_check_branch
      %18 = sbr.rel (%p16) target = $region17
    $region16: #{tpu_custom_call.1} parent=1 // pred_region
      %v19 = vld [vmem:[%s2] sm:$0x1]
      %v21 = vlaneseq
      %v22 = vshrl.u32 %v21, 7
      %v23 = vsub.s32 0, %v22
      %v24 = vrot.slane %v19, %v23
      %26 = vst [vmem:[#allocation2] sm:$0xff] %v24
    $region17: #{tpu_custom_call.1} parent=1 // pred_fallthru
      _
    %v27 = vld [vmem:[%s0] sm:$0xff]
    %v28 = vld [vmem:[%s1] sm:$0xff]
    %v29 = vld [vmem:[%s1 + $0x8] sm:$0xff]
    %v30 = vld [vmem:[%s1 + $0x10] sm:$0xff]
    %v31 = vld [vmem:[%s1 + $0x18] sm:$0xff]
    %v32 = vld [vmem:[%s1 + $0x20] sm:$0xff]
    %v33 = vld [vmem:[%s1 + $0x28] sm:$0xff]
    %v34 = vld [vmem:[%s1 + $0x30] sm:$0xff]
    %v35 = vld [vmem:[%s1 + $0x38] sm:$0xff]
    %v36 = vld [vmem:[%s1 + $0x40] sm:$0xff]
    %v37 = vld [vmem:[%s1 + $0x48] sm:$0xff]
    %v38 = vld [vmem:[%s1 + $0x50] sm:$0xff]
    %v39 = vld [vmem:[%s1 + $0x58] sm:$0xff]
    %v40 = vld [vmem:[%s1 + $0x60] sm:$0xff]
    %v41 = vld [vmem:[%s1 + $0x68] sm:$0xff]
    %v42 = vld [vmem:[%s1 + $0x70] sm:$0xff]
    %v43 = vld [vmem:[%s1 + $0x78] sm:$0xff]
    %v44 = vld [vmem:[#allocation2] sm:$0xff]
    %45 = vmatprep.subr.mxu0 0.0
    %46 = vmatpush1.msra.mxu0 %v28
    %47 = vmatprep.subr.mxu0 0.0
    %48 = vmatpush1.msra.mxu0 %v29
    %49 = vmatprep.subr.mxu0 0.0
    %50 = vmatpush1.msra.mxu0 %v30
    %51 = vmatprep.subr.mxu0 0.0
    %52 = vmatpush1.msra.mxu0 %v31
    %53 = vmatprep.subr.mxu0 0.0
    %54 = vmatpush1.msra.mxu0 %v32
    %55 = vmatprep.subr.mxu0 0.0
    %56 = vmatpush1.msra.mxu0 %v33
    %57 = vmatprep.subr.mxu0 0.0
    %58 = vmatpush1.msra.mxu0 %v34
    %59 = vmatprep.subr.mxu0 0.0
    %60 = vmatpush1.msra.mxu0 %v35
    %61 = vmatprep.subr.mxu0 0.0
    %62 = vmatpush1.msra.mxu0 %v36
    %63 = vmatprep.subr.mxu0 0.0
    %64 = vmatpush1.msra.mxu0 %v37
    %65 = vmatprep.subr.mxu0 0.0
    %66 = vmatpush1.msra.mxu0 %v38
    %67 = vmatprep.subr.mxu0 0.0
    %68 = vmatpush1.msra.mxu0 %v39
    %69 = vmatprep.subr.mxu0 0.0
    %70 = vmatpush1.msra.mxu0 %v40
    %71 = vmatprep.subr.mxu0 0.0
    %72 = vmatpush1.msra.mxu0 %v41
    %73 = vmatprep.subr.mxu0 0.0
    %74 = vmatpush1.msra.mxu0 %v42
    %75 = vmatprep.subr.mxu0 0.0
    %76 = vmatpush1.msra.mxu0 %v43
    %77 = vmatprep.subr.mxu0 0.0
    %78 = vmatpush1.msra.mxu0 0.0
    %79 = vmatprep.subr.mxu0 0.0
    %80 = vmatpush1.msra.mxu0 0.0
    %81 = vmatprep.subr.mxu0 0.0
    %82 = vmatpush1.msra.mxu0 0.0
    %83 = vmatprep.subr.mxu0 0.0
    %84 = vmatpush1.msra.mxu0 0.0
    %85 = vmatprep.subr.mxu0 0.0
    %86 = vmatpush1.msra.mxu0 0.0
    %87 = vmatprep.subr.mxu0 0.0
    %88 = vmatpush1.msra.mxu0 0.0
    %89 = vmatprep.subr.mxu0 0.0
    %90 = vmatpush1.msra.mxu0 0.0
    %91 = vmatprep.subr.mxu0 0.0
    %92 = vmatpush1.msra.mxu0 0.0
    %93 = vmatprep.subr.mxu0 0.0
    %94 = vmatpush1.msra.mxu0 0.0
    %95 = vmatprep.subr.mxu0 0.0
    %96 = vmatpush1.msra.mxu0 0.0
    %97 = vmatprep.subr.mxu0 0.0
    %98 = vmatpush1.msra.mxu0 0.0
    %99 = vmatprep.subr.mxu0 0.0
    %100 = vmatpush1.msra.mxu0 0.0
    %101 = vmatprep.subr.mxu0 0.0
    %102 = vmatpush1.msra.mxu0 0.0
    %103 = vmatprep.subr.mxu0 0.0
    %104 = vmatpush1.msra.mxu0 0.0
    %105 = vmatprep.subr.mxu0 0.0
    %106 = vmatpush1.msra.mxu0 0.0
    %107 = vmatprep.subr.mxu0 0.0
    %108 = vmatpush1.msra.mxu0 0.0
    %109 = vmatprep.mubr.f32.mxu0 0.0
    %110 = vmatmul.mubr.f32.gmra.mrb[0].mxu0 %v27
    %v111 = vpop.f32.mrb[0].mxu0
    %v112 = vadd.f32 0.0, %v111
    %v113 = vpop.f32.mrb[0].mxu0
    %114 = vdwg.mxu0
    %v115 = vadd.f32 %v44, %v112
    %116 = vst [vmem:[#allocation2] sm:$0xff] %v115
    // Predicated region
    $region18: #{tpu_custom_call.1} parent=1 // pred_check
      _
    $region19: #{tpu_custom_call.1} parent=1 // pred_check_branch
      %118 = sbr.rel (0) target = $region21
    $region20: #{tpu_custom_call.1} parent=1 // pred_region
      %s120 = ssub.s32 128, 128
      %121 = vsyncadd [#allocation3], %s120
      %s123 = sshll.u32 [#allocation2], 4
      %s124 = int_to_ptr.vmem [resolvable:$true] %s123
      %126 = dma.vmem_to_hbm [thread:$0]  %s124, 128, %s3, [#allocation3]
    $region21: #{tpu_custom_call.1} parent=1 // pred_fallthru
      _
    // Predicated region
    $region22: #{tpu_custom_call.1} parent=1 // pred_check
      _
    $region23: #{tpu_custom_call.1} parent=1 // pred_check_branch
      %128 = sbr.rel (0) target = $region25
    $region24: #{tpu_custom_call.1} parent=1 // pred_region
      %129 = dma.done [#allocation3], 128
    $region25: #{tpu_custom_call.1} parent=1 // pred_fallthru
      _
    %130 = vsyncpa [#allocation3], 1

</llo_original>
